<compile_context>
chip_gen: v6e
topology: v6e:2x2x1
jax: 0.10.0
libtpu: 0.0.40
codegen_flags: <defaults>
</compile_context>

<pallas_src>
import functools

import numpy as np

import jax
import jax.numpy as jnp
from jax.experimental import pallas as pl
from jax.experimental.pallas import tpu as pltpu

_LANE = 128  # channel dims padded to lane-dense multiples of 128


def _round_up(x, m):
    return ((x + m - 1) // m) * m


def _pad2(arr, rows, cols):
    r, c = arr.shape
    return jnp.pad(arr, ((0, rows - r), (0, cols - c)))


def _pick_tile(n_pad, cap):
    """Largest multiple of 128 that divides n_pad and is <= cap."""
    cap = max(128, min(cap, n_pad))
    best = 128
    for t in range(128, cap + 1, 128):
        if n_pad % t == 0:
            best = t
    return best


def _sage_layer_kernel(ids_ref, cnt_ref, a_ref, xs_ref, xr_ref, invdeg_ref,
                       w_ref, b_ref, o_ref, acc_ref, *, apply_relu):
    """One SAGEConv layer tile: grid = (row-tile i, nnz-block j).

    acc_ref accumulates sum_{src} A_cnt @ x across the non-zero source blocks
    of row tile i (f32).  The epilogue applies 1/deg, the fused [W_l; W_r]
    projection, bias and optional ReLU.
    """
    i = pl.program_id(0)
    j = pl.program_id(1)

    @pl.when(j == 0)
    def _init():
        acc_ref[...] = jnp.zeros_like(acc_ref)

    # Only the first cnt[i] grid steps carry a real (non-zero) source block;
    # padded steps re-use the already-resident block (same index_map value,
    # so no DMA) and are skipped here to avoid double accumulation.
    @pl.when(j < cnt_ref[i])
    def _accumulate():
        a = a_ref[...].astype(jnp.float32).astype(jnp.bfloat16)  # int8 counts
        acc_ref[...] += jnp.dot(a, xs_ref[...],
                                preferred_element_type=jnp.float32)

    @pl.when(j == pl.num_programs(1) - 1)
    def _epilogue():
        # Exact f32 mean normalization, then bf16 for the MXU.
        agg = (acc_ref[...] * invdeg_ref[...]).astype(jnp.bfloat16)
        h = jnp.concatenate([agg, xr_ref[...]], axis=-1)   # (tm, 2*c_in)
        out = jnp.dot(h, w_ref[...], preferred_element_type=jnp.float32)
        out = out + b_ref[...]
        if apply_relu:
            out = jnp.maximum(out, 0.0)
        # TODO(synk): F.dropout(p=0.1, training=True) not implemented (eval
        # mode => identity); pltpu.prng_random_bits could provide it.
        o_ref[...] = out.astype(o_ref.dtype)


def sage_conv_layer(block_ids, block_cnt, a_i8, x, inv_deg, w, b, *,
                    tm, tk, max_nnz, apply_relu, out_dtype):
    """Fused SAGEConv (+ optional ReLU) on pre-padded, lane-dense inputs.

    block_ids : (n_row_tiles * max_nnz,) int32  non-zero source-block ids
    block_cnt : (n_row_tiles,)           int32  #non-zero blocks per row tile
    a_i8      : (Np, Np)  int8  edge-multiplicity adjacency (zero padded)
    x         : (Np, Ci)  bf16  node features (zero padded)
    inv_deg   : (Np, 1)   f32   1 / max(deg, 1)
    w         : (2*Ci, Co) bf16 stacked [W_l; W_r]
    b         : (1, Co)   f32   bias
    """
    n_pad, c_in = x.shape
    c_out = w.shape[1]
    n_row_tiles = n_pad // tm
    grid = (n_row_tiles, max_nnz)

    def a_map(i, j, ids, cnt):
        return (i, ids[i * max_nnz + j])

    def xs_map(i, j, ids, cnt):
        return (ids[i * max_nnz + j], 0)

    def row_map(i, j, ids, cnt):
        return (i, 0)

    def const_map(i, j, ids, cnt):
        return (0, 0)

    # VMEM footprint (double-buffered pipeline + scratch) -> scoped limit,
    # capped at 48 MiB so the same config stays inside v7x's 64 MiB/TC.
    out_isz = np.dtype(out_dtype).itemsize
    bytes_needed = (
        2 * tm * tk                       # A int8 double-buffer
        + tm * tk * 6                     # in-kernel int8->f32->bf16 temps
        + 2 * tk * c_in * 2               # x_src bf16
        + 2 * tm * c_in * 2               # x_root bf16
        + 2 * tm * 4                      # 1/deg
        + 2 * (2 * c_in) * c_out * 2      # stacked weights bf16
        + 2 * c_out * 4                   # bias
        + 2 * tm * c_out * out_isz        # output
        + tm * c_in * 4)                  # f32 accumulator scratch
    vmem_limit = int(min(max(int(bytes_needed * 1.5), 32 * 1024 * 1024),
                         48 * 1024 * 1024))

    kernel = functools.partial(_sage_layer_kernel, apply_relu=apply_relu)
    return pl.pallas_call(
        kernel,
        out_shape=jax.ShapeDtypeStruct((n_pad, c_out), out_dtype),
        grid_spec=pltpu.PrefetchScalarGridSpec(
            num_scalar_prefetch=2,
            grid=grid,
            in_specs=[
                pl.BlockSpec((tm, tk), a_map),          # A tile (int8 counts)
                pl.BlockSpec((tk, c_in), xs_map),       # x (source rows)
                pl.BlockSpec((tm, c_in), row_map),      # x (root rows)
                pl.BlockSpec((tm, 1), row_map),         # 1/deg
                pl.BlockSpec((2 * c_in, c_out), const_map),  # [W_l; W_r]
                pl.BlockSpec((1, c_out), const_map),    # bias
            ],
            out_specs=pl.BlockSpec((tm, c_out), row_map),
            scratch_shapes=[pltpu.VMEM((tm, c_in), jnp.float32)],
        ),
        compiler_params=pltpu.CompilerParams(
            dimension_semantics=("parallel", "arbitrary"),
            vmem_limit_bytes=vmem_limit,
        ),
    )(block_ids, block_cnt, a_i8, x, x, inv_deg, w, b)


def _build_graph_blocks(edge_index, num_nodes, n_pad, tm, tk):
    """Host-side (numpy) glue: padded int8 adjacency, 1/deg and block-CSR.

    Returns (block_ids_flat, block_cnt, a_i8, inv_deg, max_nnz) where
    block_ids_flat[i*max_nnz + j] is the j-th non-zero source-block index of
    row tile i (padded by repeating the last valid id, so padded grid steps
    re-use the resident block and cost no extra DMA).
    """
    del num_nodes
    src = np.asarray(jax.device_get(edge_index[0])).astype(np.int64)
    dst = np.asarray(jax.device_get(edge_index[1])).astype(np.int64)

    # TODO(synk): for very large graphs replace this dense int8 store with a
    # true block-CSR layout + manual DMA gather; the block skipping below
    # already avoids streaming all-zero tiles.
    counts = np.zeros((n_pad, n_pad), dtype=np.int32)
    np.add.at(counts, (dst, src), 1)
    deg = counts.sum(axis=1).astype(np.float32)
    inv_deg = (1.0 / np.maximum(deg, 1.0)).reshape(n_pad, 1).astype(np.float32)
    a_i8 = counts.astype(np.int8)   # edge multiplicities (assumed < 128)

    n_row = n_pad // tm
    if src.size:
        pairs = np.unique(np.stack([dst // tm, src // tk], axis=1), axis=0)
    else:
        pairs = np.zeros((0, 2), dtype=np.int64)
    per_row = [np.sort(pairs[pairs[:, 0] == r, 1]).astype(np.int32)
               for r in range(n_row)]
    cnt = np.array([len(v) for v in per_row], dtype=np.int32)
    max_nnz = int(max(1, cnt.max()))
    ids = np.zeros((n_row, max_nnz), dtype=np.int32)
    for r, v in enumerate(per_row):
        if len(v):
            ids[r, :len(v)] = v
            ids[r, len(v):] = v[-1]   # repeat last id -> no extra DMA

    return (jnp.asarray(ids.reshape(-1)), jnp.asarray(cnt),
            jnp.asarray(a_i8), jnp.asarray(inv_deg), max_nnz)


def init_sagex_params(key, in_channels, hidden_channels, out_channels,
                      num_layers=3):
    """Per layer: W_l (C_in, C_out), W_r (C_in, C_out), b (C_out,)."""
    dims = [in_channels] + [hidden_channels] * (num_layers - 1) + [out_channels]
    params = []
    for li in range(num_layers):
        c_in, c_out = dims[li], dims[li + 1]
        key, k1, k2 = jax.random.split(key, 3)
        scale = 1.0 / jnp.sqrt(jnp.float32(c_in))
        w_l = jax.random.normal(k1, (c_in, c_out), jnp.float32) * scale
        w_r = jax.random.normal(k2, (c_in, c_out), jnp.float32) * scale
        b = jnp.zeros((c_out,), jnp.float32)
        params.append((w_l, w_r, b))
    return params


def sagex_forward(x, edge_index, params):
    n, c0 = x.shape

    # Reduction-tile cap is VMEM-generation aware (v7x: 64 MiB/TC -> tk<=1024;
    # v5e/v6e: 128 MiB -> tk<=2048).
    try:
        vmem_cap = pltpu.get_tpu_info().vmem_capacity_bytes
    except Exception:  # conservative fallback
        vmem_cap = 64 * 1024 * 1024
    tk_cap = 2048 if vmem_cap >= 100 * 1024 * 1024 else 1024

    n_pad = _round_up(n, 128)
    # Ensure >=2 row tiles whenever possible so the "parallel" row axis can
    # shard across both TensorCores on v7x.
    tm = _pick_tile(n_pad, min(512, n_pad // 2) if n_pad >= 256 else 128)
    tk = _pick_tile(n_pad, tk_cap)

    block_ids, block_cnt, a_i8, inv_deg, max_nnz = _build_graph_blocks(
        edge_index, n, n_pad, tm, tk)

    num_layers = len(params)
    c_out_final = params[-1][0].shape[1]

    h = _pad2(x.astype(jnp.float32), n_pad,
              _round_up(c0, _LANE)).astype(jnp.bfloat16)
    for li, (w_l, w_r, b) in enumerate(params):
        c_in, c_out = w_l.shape
        ci_p, co_p = _round_up(c_in, _LANE), _round_up(c_out, _LANE)
        assert h.shape == (n_pad, ci_p)
        w = jnp.concatenate(
            [_pad2(w_l, ci_p, co_p), _pad2(w_r, ci_p, co_p)],
            axis=0).astype(jnp.bfloat16)                  # (2*ci_p, co_p)
        b_p = _pad2(b.reshape(1, -1), 1, co_p).astype(jnp.float32)
        last = li == num_layers - 1
        h = sage_conv_layer(
            block_ids, block_cnt, a_i8, h, inv_deg, w, b_p,
            tm=tm, tk=tk, max_nnz=max_nnz,
            apply_relu=not last,
            out_dtype=jnp.float32 if last else jnp.bfloat16)
        # F.dropout(p=0.1) is identity in eval mode.
    return h[:n, :c_out_final]


def sagex_reference(x, edge_index, params):
    """Plain-JAX f32 reference (dense mean aggregation, edge multiplicity)."""
    n = x.shape[0]
    src, dst = edge_index[0], edge_index[1]
    a = jnp.zeros((n, n), jnp.float32).at[dst, src].add(1.0)
    deg = jnp.maximum(jnp.sum(a, axis=1, keepdims=True), 1.0)
    a = a / deg
    h = x
    for i, (w_l, w_r, b) in enumerate(params):
        h = (a @ h) @ w_l + h @ w_r + b[None, :]
        if i < len(params) - 1:
            h = jnp.maximum(h, 0.0)
    return h


if __name__ == "__main__":
    key = jax.random.PRNGKey(0)

    num_nodes = 16
    in_channels = 8
    hidden_channels = 32
    out_channels = 8
    num_edges = 40

    key, kx, ke_src, ke_dst, kp = jax.random.split(key, 5)
    x = jax.random.normal(kx, (num_nodes, in_channels), jnp.float32)
    edge_index = jnp.stack(
        [
            jax.random.randint(ke_src, (num_edges,), 0, num_nodes),
            jax.random.randint(ke_dst, (num_edges,), 0, num_nodes),
        ],
        axis=0,
    )

    params = init_sagex_params(kp, in_channels, hidden_channels, out_channels,
                               num_layers=3)

    out = sagex_forward(x, edge_index, params)
    out = jax.block_until_ready(out)
    assert out.shape == (num_nodes, out_channels), out.shape

    ref = sagex_reference(x, edge_index, params)
    err = float(jnp.max(jnp.abs(out - ref)))
    assert err < 0.3, f"max abs err vs reference: {err}"

    print("KERNEL_OK")
</pallas_src>

<mosaic_0001>
module attributes {stable_mosaic.version = 11 : i64} {
  func.func @_sage_layer_kernel(%arg0: i32, %arg1: i32, %arg2: memref<1xi32, #tpu.memory_space<smem>>, %arg3: memref<1xi32, #tpu.memory_space<smem>>, %arg4: memref<128x128xi8, #tpu.memory_space<vmem>>, %arg5: memref<128x128xbf16, #tpu.memory_space<vmem>>, %arg6: memref<128x128xbf16, #tpu.memory_space<vmem>>, %arg7: memref<128x1xf32, #tpu.memory_space<vmem>>, %arg8: memref<256x128xbf16, #tpu.memory_space<vmem>>, %arg9: memref<1x128xf32, #tpu.memory_space<vmem>>, %arg10: memref<128x128xbf16, #tpu.memory_space<vmem>>, %arg11: memref<128x128xf32, #tpu.memory_space<vmem>>) attributes {dimension_semantics = [#tpu.dimension_semantics<parallel>, #tpu.dimension_semantics<arbitrary>], iteration_bounds = array<i64: 1, 1>, scalar_prefetch = 2 : i64, scratch_operands = 1 : i64, tpu.core_type = #tpu.core_type<tc>, window_params = [{transform_indices = @transform_0, window_bounds = array<i64: 128, 128>}, {transform_indices = @transform_1, window_bounds = array<i64: 128, 128>}, {transform_indices = @transform_2, window_bounds = array<i64: 128, 128>}, {transform_indices = @transform_3, window_bounds = array<i64: 128, 1>}, {pipeline_mode = #tpu.pipeline_mode<synchronous>, transform_indices = @transform_4, window_bounds = array<i64: 256, 128>}, {pipeline_mode = #tpu.pipeline_mode<synchronous>, transform_indices = @transform_5, window_bounds = array<i64: 1, 128>}, {transform_indices = @transform_6, window_bounds = array<i64: 128, 128>}]} {
    %c0_i32 = arith.constant 0 : i32
    %0 = arith.cmpi eq, %arg1, %c0_i32 : i32
    %1 = arith.extui %0 : i1 to i32
    %c0_i32_0 = arith.constant 0 : i32
    %2 = arith.cmpi ne, %1, %c0_i32_0 : i32
    scf.if %2 {
      %cst = arith.constant 0.000000e+00 : f32
      %11 = vector.broadcast %cst : f32 to vector<128x128xf32>
      %c0 = arith.constant 0 : index
      %c0_4 = arith.constant 0 : index
      %12 = vector.load %arg11[%c0, %c0_4] : memref<128x128xf32, #tpu.memory_space<vmem>>, vector<128x128xf32>
      tpu.vector_store %arg11[%c0, %c0_4], %11 {strides = array<i32>} : memref<128x128xf32, #tpu.memory_space<vmem>>, vector<128x128xf32>,
    } else {
    }
    %3 = arith.index_cast %arg0 : i32 to index
    %4 = memref.load %arg3[%3] : memref<1xi32, #tpu.memory_space<smem>>
    %5 = arith.cmpi slt, %arg1, %4 : i32
    %6 = arith.extui %5 : i1 to i32
    %c0_i32_1 = arith.constant 0 : i32
    %7 = arith.cmpi ne, %6, %c0_i32_1 : i32
    scf.if %7 {
      %c0 = arith.constant 0 : index
      %c0_4 = arith.constant 0 : index
      %11 = vector.load %arg4[%c0, %c0_4] : memref<128x128xi8, #tpu.memory_space<vmem>>, vector<128x128xi8>
      %12 = arith.sitofp %11 : vector<128x128xi8> to vector<128x128xf32>
      %13 = arith.truncf %12 : vector<128x128xf32> to vector<128x128xbf16>
      %c0_5 = arith.constant 0 : index
      %c0_6 = arith.constant 0 : index
      %14 = vector.load %arg11[%c0_5, %c0_6] : memref<128x128xf32, #tpu.memory_space<vmem>>, vector<128x128xf32>
      %c0_7 = arith.constant 0 : index
      %c0_8 = arith.constant 0 : index
      %15 = vector.load %arg5[%c0_7, %c0_8] : memref<128x128xbf16, #tpu.memory_space<vmem>>, vector<128x128xbf16>
      %cst = arith.constant dense<0.000000e+00> : vector<128x128xf32>
      %16 = tpu.matmul %13, %15, %cst {dimension_numbers = #tpu.dot_dimension_numbers<[1], [0], [0], [1], [0, 0, 1, 1], [], []>} : vector<128x128xbf16>, vector<128x128xbf16>, vector<128x128xf32> -> vector<128x128xf32>
      %17 = arith.addf %14, %16 : vector<128x128xf32>
      %c0_9 = arith.constant 0 : index
      %c0_10 = arith.constant 0 : index
      %18 = vector.load %arg11[%c0_9, %c0_10] : memref<128x128xf32, #tpu.memory_space<vmem>>, vector<128x128xf32>
      tpu.vector_store %arg11[%c0_9, %c0_10], %17 {strides = array<i32>} : memref<128x128xf32, #tpu.memory_space<vmem>>, vector<128x128xf32>,
    } else {
    }
    %c0_i32_2 = arith.constant 0 : i32
    %8 = arith.cmpi eq, %arg1, %c0_i32_2 : i32
    %9 = arith.extui %8 : i1 to i32
    %c0_i32_3 = arith.constant 0 : i32
    %10 = arith.cmpi ne, %9, %c0_i32_3 : i32
    scf.if %10 {
      %c0 = arith.constant 0 : index
      %c0_4 = arith.constant 0 : index
      %11 = vector.load %arg11[%c0, %c0_4] : memref<128x128xf32, #tpu.memory_space<vmem>>, vector<128x128xf32>
      %c0_5 = arith.constant 0 : index
      %c0_6 = arith.constant 0 : index
      %12 = vector.load %arg7[%c0_5, %c0_6] : memref<128x1xf32, #tpu.memory_space<vmem>>, vector<128x1xf32>
      %13 = vector.broadcast %12 : vector<128x1xf32> to vector<128x128xf32>
      %14 = arith.mulf %11, %13 : vector<128x128xf32>
      %15 = arith.truncf %14 : vector<128x128xf32> to vector<128x128xbf16>
      %c0_7 = arith.constant 0 : index
      %c0_8 = arith.constant 0 : index
      %16 = vector.load %arg6[%c0_7, %c0_8] : memref<128x128xbf16, #tpu.memory_space<vmem>>, vector<128x128xbf16>
      %17 = tpu.concatenate %15, %16 in 1 : vector<128x128xbf16>, vector<128x128xbf16> -> vector<128x256xbf16>
      %c0_9 = arith.constant 0 : index
      %c0_10 = arith.constant 0 : index
      %18 = vector.load %arg8[%c0_9, %c0_10] : memref<256x128xbf16, #tpu.memory_space<vmem>>, vector<256x128xbf16>
      %cst = arith.constant dense<0.000000e+00> : vector<128x128xf32>
      %19 = tpu.matmul %17, %18, %cst {dimension_numbers = #tpu.dot_dimension_numbers<[1], [0], [0], [1], [0, 0, 1, 1], [], []>} : vector<128x256xbf16>, vector<256x128xbf16>, vector<128x128xf32> -> vector<128x128xf32>
      %c0_11 = arith.constant 0 : index
      %c0_12 = arith.constant 0 : index
      %20 = vector.load %arg9[%c0_11, %c0_12] : memref<1x128xf32, #tpu.memory_space<vmem>>, vector<1x128xf32>
      %21 = vector.broadcast %20 : vector<1x128xf32> to vector<128x128xf32>
      %22 = arith.addf %19, %21 : vector<128x128xf32>
      %cst_13 = arith.constant 0.000000e+00 : f32
      %23 = vector.broadcast %cst_13 : f32 to vector<128x128xf32>
      %24 = arith.maximumf %22, %23 : vector<128x128xf32>
      %25 = arith.truncf %24 : vector<128x128xf32> to vector<128x128xbf16>
      %c0_14 = arith.constant 0 : index
      %c0_15 = arith.constant 0 : index
      %26 = vector.load %arg10[%c0_14, %c0_15] : memref<128x128xbf16, #tpu.memory_space<vmem>>, vector<128x128xbf16>
      tpu.vector_store %arg10[%c0_14, %c0_15], %25 {strides = array<i32>} : memref<128x128xbf16, #tpu.memory_space<vmem>>, vector<128x128xbf16>,
    } else {
    }
    return
  }
  func.func @transform_0(%arg0: i32, %arg1: i32, %arg2: memref<1xi32, #tpu.memory_space<smem>>, %arg3: memref<1xi32, #tpu.memory_space<smem>>) -> (i32, i32) {
    %c1_i32 = arith.constant 1 : i32
    %0 = arith.muli %arg0, %c1_i32 : i32
    %1 = arith.addi %0, %arg1 : i32
    %2 = arith.index_cast %1 : i32 to index
    %3 = memref.load %arg2[%2] : memref<1xi32, #tpu.memory_space<smem>>
    %c0_i32 = arith.constant 0 : i32
    return %arg0, %3 : i32, i32
  }
  func.func @transform_1(%arg0: i32, %arg1: i32, %arg2: memref<1xi32, #tpu.memory_space<smem>>, %arg3: memref<1xi32, #tpu.memory_space<smem>>) -> (i32, i32) {
    %c1_i32 = arith.constant 1 : i32
    %0 = arith.muli %arg0, %c1_i32 : i32
    %1 = arith.addi %0, %arg1 : i32
    %2 = arith.index_cast %1 : i32 to index
    %3 = memref.load %arg2[%2] : memref<1xi32, #tpu.memory_space<smem>>
    %c0_i32 = arith.constant 0 : i32
    %c0_i32_0 = arith.constant 0 : i32
    return %3, %c0_i32 : i32, i32
  }
  func.func @transform_2(%arg0: i32, %arg1: i32, %arg2: memref<1xi32, #tpu.memory_space<smem>>, %arg3: memref<1xi32, #tpu.memory_space<smem>>) -> (i32, i32) {
    %c0_i32 = arith.constant 0 : i32
    %c0_i32_0 = arith.constant 0 : i32
    return %arg0, %c0_i32 : i32, i32
  }
  func.func @transform_3(%arg0: i32, %arg1: i32, %arg2: memref<1xi32, #tpu.memory_space<smem>>, %arg3: memref<1xi32, #tpu.memory_space<smem>>) -> (i32, i32) {
    %c0_i32 = arith.constant 0 : i32
    %c0_i32_0 = arith.constant 0 : i32
    return %arg0, %c0_i32 : i32, i32
  }
  func.func @transform_4(%arg0: i32, %arg1: i32, %arg2: memref<1xi32, #tpu.memory_space<smem>>, %arg3: memref<1xi32, #tpu.memory_space<smem>>) -> (i32, i32) {
    %c0_i32 = arith.constant 0 : i32
    %c0_i32_0 = arith.constant 0 : i32
    %c0_i32_1 = arith.constant 0 : i32
    return %c0_i32, %c0_i32_0 : i32, i32
  }
  func.func @transform_5(%arg0: i32, %arg1: i32, %arg2: memref<1xi32, #tpu.memory_space<smem>>, %arg3: memref<1xi32, #tpu.memory_space<smem>>) -> (i32, i32) {
    %c0_i32 = arith.constant 0 : i32
    %c0_i32_0 = arith.constant 0 : i32
    %c0_i32_1 = arith.constant 0 : i32
    return %c0_i32, %c0_i32_0 : i32, i32
  }
  func.func @transform_6(%arg0: i32, %arg1: i32, %arg2: memref<1xi32, #tpu.memory_space<smem>>, %arg3: memref<1xi32, #tpu.memory_space<smem>>) -> (i32, i32) {
    %c0_i32 = arith.constant 0 : i32
    %c0_i32_0 = arith.constant 0 : i32
    return %arg0, %c0_i32 : i32, i32
  }
}

</mosaic_0001>

<llo_original>
// kernel: tpu_custom_call.1
$region0: #{tpu_custom_call.1}
  #allocation0 [shape = 'u32[]', space=smem, size = 0x4, offset = 0x4, fixed_abs, tag = 'smem constant byte address 0x4 - core index']
  #allocation1 [shape = 'u32[144,128]{1,0:T(1,128)}', space=vmem, size = 0x12000, scoped, tag = 'internal scratch']
  #allocation2 [shape = 'f32[128,128]{1,0:T(8,128)}', space=vmem, size = 0x10000, scoped, tag = 'scratch operand']
  #allocation3 [shape = 's32[1]{0}', space=sflag, size = 0x4, scoped, tag = 'scoped memory for tpu_custom_call.1']
  #allocation4 [shape = 's32[1]{0:T(128)S(6)}', space=smem, size = 0x200, scoped, tag = 'prefetched SMEM operand 0']
  #allocation5 [shape = 's32[1]{0:T(128)S(6)}', space=smem, size = 0x200, scoped, tag = 'prefetched SMEM operand 1']
  %s0 = inlined_call_operand.<no memory space> [shape: s32[1], index: 0, kind: input, shape index: {}]
  %s1 = inlined_call_operand.<no memory space> [shape: s32[1], index: 1, kind: input, shape index: {}]
  %s2 = inlined_call_operand.hbm [shape: s8[128,128], index: 2, kind: input, shape index: {}]
  %s3 = inlined_call_operand.hbm [shape: bf16[128,128], index: 3, kind: input, shape index: {}]
  %s4 = inlined_call_operand.hbm [shape: bf16[128,128], index: 4, kind: input, shape index: {}]
  %s5 = inlined_call_operand.vmem [shape: f32[128,1], index: 5, kind: input, shape index: {}]
  %s6 = inlined_call_operand.vmem [shape: bf16[256,128], index: 6, kind: input, shape index: {}]
  %s7 = inlined_call_operand.vmem [shape: f32[1,128], index: 7, kind: input, shape index: {}]
  %s8 = inlined_call_operand.hbm [shape: bf16[128,128], index: 8, kind: output, shape index: {}]
  %s9 = sld [smem:[#allocation0]]
  $region58: #{tpu_custom_call.1} parent=0
    _
  %s11 = ssub.s32 1, %s9
  %s12 = scalar_select 0, %s11, %s9
  %13 = sst [smem:[#allocation4]] %s0
  %14 = sst [smem:[#allocation5]] %s1
  $region1: #{tpu_custom_call.1} parent=0
    #allocation6 [shape = 'u8[16384]{0}', space=vmem, size = 0x4000, scoped, tag = 'input window, operand 2, single buffered']
    #allocation7 [shape = 's32[1]{0}', space=sflag, size = 0x4, scoped, tag = 'scoped memory for tpu_custom_call.1']
    #allocation8 [shape = 's32[1]{0}', space=sflag, size = 0x4, scoped, tag = 'scoped memory for tpu_custom_call.1']
    #allocation9 [shape = 'u8[32768]{0}', space=vmem, size = 0x8000, scoped, tag = 'input window, operand 3, single buffered']
    #allocation10 [shape = 's32[1]{0}', space=sflag, size = 0x4, scoped, tag = 'scoped memory for tpu_custom_call.1']
    #allocation11 [shape = 'u8[32768]{0}', space=vmem, size = 0x8000, scoped, tag = 'input window, operand 4, single buffered']
    #allocation12 [shape = 'u8[32768]{0}', space=vmem, size = 0x8000, scoped, tag = 'output window, operand 0, single buffered']
    %15 = vsyncpa [#allocation7], 0
    %16 = vsyncpa [#allocation10], 0
    %17 = vsyncpa [#allocation8], 0
    // Predicated region
    $region2: #{tpu_custom_call.1} parent=1 // pred_check
      _
    $region3: #{tpu_custom_call.1} parent=1 // pred_check_branch
      %19 = sbr.rel (0) target = $region5
    $region4: #{tpu_custom_call.1} parent=1 // pred_region
      %s20 = sadd.s32 0, 0
      %s21 = sld [smem:[#allocation4 + %s20]]
      %s23 = ssub.s32 512, 512
      %24 = vsyncadd [#allocation7], %s23
      %s25 = smul.addr %s21, 128
      %s26 = scalar_lea.hbm %s2, %s25
      %s27 = sshll.u32 [#allocation6], 4
      %s28 = int_to_ptr.vmem [resolvable:$true] %s27
      %33 = dma.hbm_to_vmem [thread:$0]  %s26, 512, %s28, [#allocation7], 128, 128, 8
    $region5: #{tpu_custom_call.1} parent=1 // pred_fallthru
      _
    // Predicated region
    $region6: #{tpu_custom_call.1} parent=1 // pred_check
      _
    $region7: #{tpu_custom_call.1} parent=1 // pred_check_branch
      %35 = sbr.rel (0) target = $region9
    $region8: #{tpu_custom_call.1} parent=1 // pred_region
      %s36 = sadd.s32 0, 0
      %s37 = sld [smem:[#allocation4 + %s36]]
      %s38 = smul.u32 16, %s37
      %s40 = ssub.s32 1024, 1024
      %41 = vsyncadd [#allocation10], %s40
      %s42 = smul.addr %s38, 64
      %s43 = scalar_lea.hbm %s3, %s42
      %s44 = sshll.u32 [#allocation9], 4
      %s45 = int_to_ptr.vmem [resolvable:$true] %s44
      %50 = dma.hbm_to_vmem [thread:$0]  %s43, 1024, %s45, [#allocation10], 64, 64, 4
    $region9: #{tpu_custom_call.1} parent=1 // pred_fallthru
      _
    // Predicated region
    $region10: #{tpu_custom_call.1} parent=1 // pred_check
      _
    $region11: #{tpu_custom_call.1} parent=1 // pred_check_branch
      %52 = sbr.rel (0) target = $region13
    $region12: #{tpu_custom_call.1} parent=1 // pred_region
      %s54 = ssub.s32 1024, 1024
      %55 = vsyncadd [#allocation10], %s54
      %s56 = sshll.u32 [#allocation11], 4
      %s57 = int_to_ptr.vmem [resolvable:$true] %s56
      %62 = dma.hbm_to_vmem [thread:$0]  %s4, 1024, %s57, [#allocation10], 64, 64, 4
    $region13: #{tpu_custom_call.1} parent=1 // pred_fallthru
      _
    // Predicated region
    $region14: #{tpu_custom_call.1} parent=1 // pred_check
      _
    $region15: #{tpu_custom_call.1} parent=1 // pred_check_branch
      %64 = sbr.rel (0) target = $region17
    $region16: #{tpu_custom_call.1} parent=1 // pred_region
      _
    $region17: #{tpu_custom_call.1} parent=1 // pred_fallthru
      _
    // Predicated region
    $region18: #{tpu_custom_call.1} parent=1 // pred_check
      _
    $region19: #{tpu_custom_call.1} parent=1 // pred_check_branch
      %66 = sbr.rel (0) target = $region21
    $region20: #{tpu_custom_call.1} parent=1 // pred_region
      _
    $region21: #{tpu_custom_call.1} parent=1 // pred_fallthru
      _
    // Predicated region
    $region22: #{tpu_custom_call.1} parent=1 // pred_check
      _
    $region23: #{tpu_custom_call.1} parent=1 // pred_check_branch
      %68 = sbr.rel (0) target = $region25
    $region24: #{tpu_custom_call.1} parent=1 // pred_region
      _
    $region25: #{tpu_custom_call.1} parent=1 // pred_fallthru
      _
    // Predicated region
    $region26: #{tpu_custom_call.1} parent=1 // pred_check
      _
    $region27: #{tpu_custom_call.1} parent=1 // pred_check_branch
      %70 = sbr.rel (0) target = $region29
    $region28: #{tpu_custom_call.1} parent=1 // pred_region
      %71 = dma.done [#allocation7], 512
    $region29: #{tpu_custom_call.1} parent=1 // pred_fallthru
      _
    // Predicated region
    $region30: #{tpu_custom_call.1} parent=1 // pred_check
      _
    $region31: #{tpu_custom_call.1} parent=1 // pred_check_branch
      %73 = sbr.rel (0) target = $region33
    $region32: #{tpu_custom_call.1} parent=1 // pred_region
      %74 = dma.done [#allocation10], 1024
    $region33: #{tpu_custom_call.1} parent=1 // pred_fallthru
      _
    // Predicated region
    $region34: #{tpu_custom_call.1} parent=1 // pred_check
      _
    $region35: #{tpu_custom_call.1} parent=1 // pred_check_branch
      %76 = sbr.rel (0) target = $region37
    $region36: #{tpu_custom_call.1} parent=1 // pred_region
      %77 = dma.done [#allocation10], 1024
    $region37: #{tpu_custom_call.1} parent=1 // pred_fallthru
      _
    %s78 = sadd.s32 0, 0
    %s79 = sld [smem:[#allocation4 + %s78]]
    %s80 = sadd.s32 0, 0
    %s81 = sld [smem:[#allocation4 + %s80]]
    %s82 = smul.u32 16, %s81
    %p84 = scmp.eq.s32.totalorder 0, 0
    // Predicated region
    $region38: #{tpu_custom_call.1} parent=1 // pred_check
      %p85 = pneg %p84
    $region39: #{tpu_custom_call.1} parent=1 // pred_check_branch
      %87 = sbr.rel (%p85) target = $region41
    $region40: #{tpu_custom_call.1} parent=1 // pred_region
      %88 = vst [vmem:[#allocation2] sm:$0xff] 0.0
      %89 = vst [vmem:[#allocation2 + $0x8] sm:$0xff] 0.0
      %90 = vst [vmem:[#allocation2 + $0x10] sm:$0xff] 0.0
      %91 = vst [vmem:[#allocation2 + $0x18] sm:$0xff] 0.0
      %92 = vst [vmem:[#allocation2 + $0x20] sm:$0xff] 0.0
      %93 = vst [vmem:[#allocation2 + $0x28] sm:$0xff] 0.0
      %94 = vst [vmem:[#allocation2 + $0x30] sm:$0xff] 0.0
      %95 = vst [vmem:[#allocation2 + $0x38] sm:$0xff] 0.0
      %96 = vst [vmem:[#allocation2 + $0x40] sm:$0xff] 0.0
      %97 = vst [vmem:[#allocation2 + $0x48] sm:$0xff] 0.0
      %98 = vst [vmem:[#allocation2 + $0x50] sm:$0xff] 0.0
      %99 = vst [vmem:[#allocation2 + $0x58] sm:$0xff] 0.0
      %100 = vst [vmem:[#allocation2 + $0x60] sm:$0xff] 0.0
      %101 = vst [vmem:[#allocation2 + $0x68] sm:$0xff] 0.0
      %102 = vst [vmem:[#allocation2 + $0x70] sm:$0xff] 0.0
      %103 = vst [vmem:[#allocation2 + $0x78] sm:$0xff] 0.0
    $region41: #{tpu_custom_call.1} parent=1 // pred_fallthru
      _
    %s104 = sld [smem:[#allocation5]]
    %p105 = scmp.lt.s32.totalorder 0, %s104
    // Predicated region
    $region42: #{tpu_custom_call.1} parent=1 // pred_check
      %p106 = pneg %p105
    $region43: #{tpu_custom_call.1} parent=1 // pred_check_branch
      %108 = sbr.rel (%p106) target = $region45
    $region44: #{tpu_custom_call.1} parent=1 // pred_region
      %v109 = vld [vmem:[#allocation6] sm:$0xff]
      %v110 = vld [vmem:[#allocation6 + $0x8] sm:$0xff]
      %v111 = vld [vmem:[#allocation6 + $0x10] sm:$0xff]
      %v112 = vld [vmem:[#allocation6 + $0x18] sm:$0xff]
      %v113 = vunpack.c.l.s8.bf16 %v109
      %v114 = vunpack.c.h.s8.bf16 %v109
      %v115 = vunpack.c.l.s8.bf16 %v110
      %v116 = vunpack.c.h.s8.bf16 %v110
      %v117 = vunpack.c.l.s8.bf16 %v111
      %v118 = vunpack.c.h.s8.bf16 %v111
      %v119 = vunpack.c.l.s8.bf16 %v112
      %v120 = vunpack.c.h.s8.bf16 %v112
      %v121 = vld [vmem:[#allocation2] sm:$0xff]
      %v122 = vld [vmem:[#allocation2 + $0x8] sm:$0xff]
      %v123 = vld [vmem:[#allocation2 + $0x10] sm:$0xff]
      %v124 = vld [vmem:[#allocation2 + $0x18] sm:$0xff]
      %v125 = vld [vmem:[#allocation2 + $0x20] sm:$0xff]
      %v126 = vld [vmem:[#allocation2 + $0x28] sm:$0xff]
      %v127 = vld [vmem:[#allocation2 + $0x30] sm:$0xff]
      %v128 = vld [vmem:[#allocation2 + $0x38] sm:$0xff]
      %v129 = vld [vmem:[#allocation2 + $0x40] sm:$0xff]
      %v130 = vld [vmem:[#allocation2 + $0x48] sm:$0xff]
      %v131 = vld [vmem:[#allocation2 + $0x50] sm:$0xff]
      %v132 = vld [vmem:[#allocation2 + $0x58] sm:$0xff]
      %v133 = vld [vmem:[#allocation2 + $0x60] sm:$0xff]
      %v134 = vld [vmem:[#allocation2 + $0x68] sm:$0xff]
      %v135 = vld [vmem:[#allocation2 + $0x70] sm:$0xff]
      %v136 = vld [vmem:[#allocation2 + $0x78] sm:$0xff]
      %v137 = vld [vmem:[#allocation9] sm:$0xf]
      %v138 = vld [vmem:[#allocation9 + $0x4] sm:$0xf]
      %v139 = vld [vmem:[#allocation9 + $0x8] sm:$0xf]
      %v140 = vld [vmem:[#allocation9 + $0xc] sm:$0xf]
      %v141 = vld [vmem:[#allocation9 + $0x10] sm:$0xf]
      %v142 = vld [vmem:[#allocation9 + $0x14] sm:$0xf]
      %v143 = vld [vmem:[#allocation9 + $0x18] sm:$0xf]
      %v144 = vld [vmem:[#allocation9 + $0x1c] sm:$0xf]
      %v145 = vld [vmem:[#allocation9 + $0x20] sm:$0xf]
      %v146 = vld [vmem:[#allocation9 + $0x24] sm:$0xf]
      %v147 = vld [vmem:[#allocation9 + $0x28] sm:$0xf]
      %v148 = vld [vmem:[#allocation9 + $0x2c] sm:$0xf]
      %v149 = vld [vmem:[#allocation9 + $0x30] sm:$0xf]
      %v150 = vld [vmem:[#allocation9 + $0x34] sm:$0xf]
      %v151 = vld [vmem:[#allocation9 + $0x38] sm:$0xf]
      %v152 = vld [vmem:[#allocation9 + $0x3c] sm:$0xf]
      %v169 = vunpack.c.l.b16 %v137
      %v170 = vunpack.c.l.b16 %v138
      %v171 = vunpack.c.l.b16 %v139
      %v172 = vunpack.c.l.b16 %v140
      %v173 = vunpack.c.l.b16 %v141
      %v174 = vunpack.c.l.b16 %v142
      %v175 = vunpack.c.l.b16 %v143
      %v176 = vunpack.c.l.b16 %v144
      %v177 = vunpack.c.l.b16 %v145
      %v178 = vunpack.c.l.b16 %v146
      %v179 = vunpack.c.l.b16 %v147
      %v180 = vunpack.c.l.b16 %v148
      %v181 = vunpack.c.l.b16 %v149
      %v182 = vunpack.c.l.b16 %v150
      %v183 = vunpack.c.l.b16 %v151
      %v184 = vunpack.c.l.b16 %v152
      %v185 = vpack.c.b16 %v170, %v169
      %v186 = vpack.c.b16 %v172, %v171
      %v187 = vpack.c.b16 %v174, %v173
      %v188 = vpack.c.b16 %v176, %v175
      %v189 = vpack.c.b16 %v178, %v177
      %v190 = vpack.c.b16 %v180, %v179
      %v191 = vpack.c.b16 %v182, %v181
      %v192 = vpack.c.b16 %v184, %v183
      %201 = vmatprep.subr.bf16.mxu0 0
      %202 = vmatpush1.bf16.msra.mxu0 %v192
      %203 = vmatprep.subr.bf16.mxu0 0
      %204 = vmatpush1.bf16.msra.mxu0 %v191
      %205 = vmatprep.subr.bf16.mxu0 0
      %206 = vmatpush1.bf16.msra.mxu0 %v190
      %207 = vmatprep.subr.bf16.mxu0 0
      %208 = vmatpush1.bf16.msra.mxu0 %v189
      %209 = vmatprep.subr.bf16.mxu0 0
      %210 = vmatpush1.bf16.msra.mxu0 %v188
      %211 = vmatprep.subr.bf16.mxu0 0
      %212 = vmatpush1.bf16.msra.mxu0 %v187
      %213 = vmatprep.subr.bf16.mxu0 0
      %214 = vmatpush1.bf16.msra.mxu0 %v186
      %215 = vmatprep.subr.bf16.mxu0 0
      %216 = vmatpush1.bf16.msra.mxu0 %v185
      %217 = vmatprep.subr.bf16.mxu0 0
      %218 = vmatpush2.bf16.msra.mxu0 0
      %219 = vmatprep.subr.bf16.mxu0 0
      %220 = vmatpush2.bf16.msra.mxu0 0
      %221 = vmatprep.subr.bf16.mxu0 0
      %222 = vmatpush2.bf16.msra.mxu0 0
      %223 = vmatprep.subr.bf16.mxu0 0
      %224 = vmatpush2.bf16.msra.mxu0 0
      %225 = vmatprep.subr.bf16.mxu0 0
      %226 = vmatpush2.bf16.msra.mxu0 0
      %227 = vmatprep.subr.bf16.mxu0 0
      %228 = vmatpush2.bf16.msra.mxu0 0
      %229 = vmatprep.subr.bf16.mxu0 0
      %230 = vmatpush2.bf16.msra.mxu0 0
      %231 = vmatprep.subr.bf16.mxu0 0
      %232 = vmatpush2.bf16.msra.mxu0 0
      %233 = vmatprep.mubr.bf16.mxu0 0
      %234 = vmatmul.mubr.bf16.gmra.mxu0 %v113
      %v235 = vpop.f32.mrf.mxu0
      %v236 = vadd.f32 0.0, %v235
      %v237 = vpop.f32.mrf.mxu0
      %v238 = vpop.f32.mrf.mxu0
      %v239 = vadd.f32 0.0, %v238
      %v240 = vpop.f32.mrf.mxu0
      %241 = vmatprep.mubr.bf16.mxu0 0
      %242 = vmatmul.mubr.bf16.gmra.mxu0 %v114
      %v243 = vpop.f32.mrf.mxu0
      %v244 = vadd.f32 0.0, %v243
      %v245 = vpop.f32.mrf.mxu0
      %v246 = vpop.f32.mrf.mxu0
      %v247 = vadd.f32 0.0, %v246
      %v248 = vpop.f32.mrf.mxu0
      %249 = vmatprep.mubr.bf16.mxu0 0
      %250 = vmatmul.mubr.bf16.gmra.mxu0 %v115
      %v251 = vpop.f32.mrf.mxu0
      %v252 = vadd.f32 0.0, %v251
      %v253 = vpop.f32.mrf.mxu0
      %v254 = vpop.f32.mrf.mxu0
      %v255 = vadd.f32 0.0, %v254
      %v256 = vpop.f32.mrf.mxu0
      %257 = vmatprep.mubr.bf16.mxu0 0
      %258 = vmatmul.mubr.bf16.gmra.mxu0 %v116
      %v259 = vpop.f32.mrf.mxu0
      %v260 = vadd.f32 0.0, %v259
      %v261 = vpop.f32.mrf.mxu0
      %v262 = vpop.f32.mrf.mxu0
      %v263 = vadd.f32 0.0, %v262
      %v264 = vpop.f32.mrf.mxu0
      %265 = vmatprep.mubr.bf16.mxu0 0
      %266 = vmatmul.mubr.bf16.gmra.mxu0 %v117
      %v267 = vpop.f32.mrf.mxu0
      %v268 = vadd.f32 0.0, %v267
      %v269 = vpop.f32.mrf.mxu0
      %v270 = vpop.f32.mrf.mxu0
      %v271 = vadd.f32 0.0, %v270
      %v272 = vpop.f32.mrf.mxu0
      %273 = vmatprep.mubr.bf16.mxu0 0
      %274 = vmatmul.mubr.bf16.gmra.mxu0 %v118
      %v275 = vpop.f32.mrf.mxu0
      %v276 = vadd.f32 0.0, %v275
      %v277 = vpop.f32.mrf.mxu0
      %v278 = vpop.f32.mrf.mxu0
      %v279 = vadd.f32 0.0, %v278
      %v280 = vpop.f32.mrf.mxu0
      %281 = vmatprep.mubr.bf16.mxu0 0
      %282 = vmatmul.mubr.bf16.gmra.mxu0 %v119
      %v283 = vpop.f32.mrf.mxu0
      %v284 = vadd.f32 0.0, %v283
      %v285 = vpop.f32.mrf.mxu0
      %v286 = vpop.f32.mrf.mxu0
      %v287 = vadd.f32 0.0, %v286
      %v288 = vpop.f32.mrf.mxu0
      %289 = vmatprep.mubr.bf16.mxu0 0
      %290 = vmatmul.mubr.bf16.gmra.mxu0 %v120
      %v291 = vpop.f32.mrf.mxu0
      %v292 = vadd.f32 0.0, %v291
      %v293 = vpop.f32.mrf.mxu0
      %v294 = vpop.f32.mrf.mxu0
      %v295 = vadd.f32 0.0, %v294
      %v296 = vpop.f32.mrf.mxu0
      %297 = vdwg.mxu0
      %v298 = vadd.f32 %v121, %v236
      %v299 = vadd.f32 %v122, %v239
      %v300 = vadd.f32 %v123, %v244
      %v301 = vadd.f32 %v124, %v247
      %v302 = vadd.f32 %v125, %v252
      %v303 = vadd.f32 %v126, %v255
      %v304 = vadd.f32 %v127, %v260
      %v305 = vadd.f32 %v128, %v263
      %v306 = vadd.f32 %v129, %v268
      %v307 = vadd.f32 %v130, %v271
      %v308 = vadd.f32 %v131, %v276
      %v309 = vadd.f32 %v132, %v279
      %v310 = vadd.f32 %v133, %v284
      %v311 = vadd.f32 %v134, %v287
      %v312 = vadd.f32 %v135, %v292
      %v313 = vadd.f32 %v136, %v295
      %314 = vst [vmem:[#allocation2] sm:$0xff] %v298
      %315 = vst [vmem:[#allocation2 + $0x8] sm:$0xff] %v299
      %316 = vst [vmem:[#allocation2 + $0x10] sm:$0xff] %v300
      %317 = vst [vmem:[#allocation2 + $0x18] sm:$0xff] %v301
      %318 = vst [vmem:[#allocation2 + $0x20] sm:$0xff] %v302
      %319 = vst [vmem:[#allocation2 + $0x28] sm:$0xff] %v303
      %320 = vst [vmem:[#allocation2 + $0x30] sm:$0xff] %v304
      %321 = vst [vmem:[#allocation2 + $0x38] sm:$0xff] %v305
      %322 = vst [vmem:[#allocation2 + $0x40] sm:$0xff] %v306
      %323 = vst [vmem:[#allocation2 + $0x48] sm:$0xff] %v307
      %324 = vst [vmem:[#allocation2 + $0x50] sm:$0xff] %v308
      %325 = vst [vmem:[#allocation2 + $0x58] sm:$0xff] %v309
      %326 = vst [vmem:[#allocation2 + $0x60] sm:$0xff] %v310
      %327 = vst [vmem:[#allocation2 + $0x68] sm:$0xff] %v311
      %328 = vst [vmem:[#allocation2 + $0x70] sm:$0xff] %v312
      %329 = vst [vmem:[#allocation2 + $0x78] sm:$0xff] %v313
    $region45: #{tpu_custom_call.1} parent=1 // pred_fallthru
      _
    // Predicated region
    $region46: #{tpu_custom_call.1} parent=1 // pred_check
      %p330 = pneg %p84
    $region47: #{tpu_custom_call.1} parent=1 // pred_check_branch
      %332 = sbr.rel (%p330) target = $region49
    $region48: #{tpu_custom_call.1} parent=1 // pred_region
      %v333 = vld [vmem:[#allocation2] sm:$0xff]
      %v334 = vld [vmem:[#allocation2 + $0x8] sm:$0xff]
      %v335 = vld [vmem:[#allocation2 + $0x10] sm:$0xff]
      %v336 = vld [vmem:[#allocation2 + $0x18] sm:$0xff]
      %v337 = vld [vmem:[#allocation2 + $0x20] sm:$0xff]
      %v338 = vld [vmem:[#allocation2 + $0x28] sm:$0xff]
      %v339 = vld [vmem:[#allocation2 + $0x30] sm:$0xff]
      %v340 = vld [vmem:[#allocation2 + $0x38] sm:$0xff]
      %v341 = vld [vmem:[#allocation2 + $0x40] sm:$0xff]
      %v342 = vld [vmem:[#allocation2 + $0x48] sm:$0xff]
      %v343 = vld [vmem:[#allocation2 + $0x50] sm:$0xff]
      %v344 = vld [vmem:[#allocation2 + $0x58] sm:$0xff]
      %v345 = vld [vmem:[#allocation2 + $0x60] sm:$0xff]
      %v346 = vld [vmem:[#allocation2 + $0x68] sm:$0xff]
      %v347 = vld [vmem:[#allocation2 + $0x70] sm:$0xff]
      %v348 = vld [vmem:[#allocation2 + $0x78] sm:$0xff]
      %v349 = vld [vmem:[%s5] sm:$0xff]
      %v350 = vld [vmem:[%s5 + $0x8] sm:$0xff]
      %v351 = vld [vmem:[%s5 + $0x10] sm:$0xff]
      %v352 = vld [vmem:[%s5 + $0x18] sm:$0xff]
      %v353 = vld [vmem:[%s5 + $0x20] sm:$0xff]
      %v354 = vld [vmem:[%s5 + $0x28] sm:$0xff]
      %v355 = vld [vmem:[%s5 + $0x30] sm:$0xff]
      %v356 = vld [vmem:[%s5 + $0x38] sm:$0xff]
      %v357 = vld [vmem:[%s5 + $0x40] sm:$0xff]
      %v358 = vld [vmem:[%s5 + $0x48] sm:$0xff]
      %v359 = vld [vmem:[%s5 + $0x50] sm:$0xff]
      %v360 = vld [vmem:[%s5 + $0x58] sm:$0xff]
      %v361 = vld [vmem:[%s5 + $0x60] sm:$0xff]
      %v362 = vld [vmem:[%s5 + $0x68] sm:$0xff]
      %v363 = vld [vmem:[%s5 + $0x70] sm:$0xff]
      %v364 = vld [vmem:[%s5 + $0x78] sm:$0xff]
      %366 = vset.pattern.permute.xlu0 0
      %367 = vperm.xlu0 %366, %v349
      %v368 = vpop.permute.xlu0 %367
      %371 = vset.pattern.permute.xlu0 0
      %372 = vperm.xlu0 %371, %v350
      %v373 = vpop.permute.xlu0 %372
      %376 = vset.pattern.permute.xlu0 0
      %377 = vperm.xlu0 %376, %v351
      %v378 = vpop.permute.xlu0 %377
      %381 = vset.pattern.permute.xlu0 0
      %382 = vperm.xlu0 %381, %v352
      %v383 = vpop.permute.xlu0 %382
      %386 = vset.pattern.permute.xlu0 0
      %387 = vperm.xlu0 %386, %v353
      %v388 = vpop.permute.xlu0 %387
      %391 = vset.pattern.permute.xlu0 0
      %392 = vperm.xlu0 %391, %v354
      %v393 = vpop.permute.xlu0 %392
      %396 = vset.pattern.permute.xlu0 0
      %397 = vperm.xlu0 %396, %v355
      %v398 = vpop.permute.xlu0 %397
      %401 = vset.pattern.permute.xlu0 0
      %402 = vperm.xlu0 %401, %v356
      %v403 = vpop.permute.xlu0 %402
      %406 = vset.pattern.permute.xlu0 0
      %407 = vperm.xlu0 %406, %v357
      %v408 = vpop.permute.xlu0 %407
      %411 = vset.pattern.permute.xlu0 0
      %412 = vperm.xlu0 %411, %v358
      %v413 = vpop.permute.xlu0 %412
      %416 = vset.pattern.permute.xlu0 0
      %417 = vperm.xlu0 %416, %v359
      %v418 = vpop.permute.xlu0 %417
      %421 = vset.pattern.permute.xlu0 0
      %422 = vperm.xlu0 %421, %v360
      %v423 = vpop.permute.xlu0 %422
      %426 = vset.pattern.permute.xlu0 0
      %427 = vperm.xlu0 %426, %v361
      %v428 = vpop.permute.xlu0 %427
      %431 = vset.pattern.permute.xlu0 0
      %432 = vperm.xlu0 %431, %v362
      %v433 = vpop.permute.xlu0 %432
      %436 = vset.pattern.permute.xlu0 0
      %437 = vperm.xlu0 %436, %v363
      %v438 = vpop.permute.xlu0 %437
      %441 = vset.pattern.permute.xlu0 0
      %442 = vperm.xlu0 %441, %v364
      %v443 = vpop.permute.xlu0 %442
      %v445 = vmul.f32 %v333, %v368
      %v446 = vmul.f32 %v334, %v373
      %v447 = vmul.f32 %v335, %v378
      %v448 = vmul.f32 %v336, %v383
      %v449 = vmul.f32 %v337, %v388
      %v450 = vmul.f32 %v338, %v393
      %v451 = vmul.f32 %v339, %v398
      %v452 = vmul.f32 %v340, %v403
      %v453 = vmul.f32 %v341, %v408
      %v454 = vmul.f32 %v342, %v413
      %v455 = vmul.f32 %v343, %v418
      %v456 = vmul.f32 %v344, %v423
      %v457 = vmul.f32 %v345, %v428
      %v458 = vmul.f32 %v346, %v433
      %v459 = vmul.f32 %v347, %v438
      %v460 = vmul.f32 %v348, %v443
      %v461 = vpack.c.bf16 %v446, %v445
      %v462 = vpack.c.bf16 %v448, %v447
      %v463 = vpack.c.bf16 %v450, %v449
      %v464 = vpack.c.bf16 %v452, %v451
      %v465 = vpack.c.bf16 %v454, %v453
      %v466 = vpack.c.bf16 %v456, %v455
      %v467 = vpack.c.bf16 %v458, %v457
      %v468 = vpack.c.bf16 %v460, %v459
      %v469 = vld [vmem:[#allocation11] sm:$0xf]
      %v470 = vld [vmem:[#allocation11 + $0x4] sm:$0xf]
      %v471 = vld [vmem:[#allocation11 + $0x8] sm:$0xf]
      %v472 = vld [vmem:[#allocation11 + $0xc] sm:$0xf]
      %v473 = vld [vmem:[#allocation11 + $0x10] sm:$0xf]
      %v474 = vld [vmem:[#allocation11 + $0x14] sm:$0xf]
      %v475 = vld [vmem:[#allocation11 + $0x18] sm:$0xf]
      %v476 = vld [vmem:[#allocation11 + $0x1c] sm:$0xf]
      %v477 = vld [vmem:[#allocation11 + $0x20] sm:$0xf]
      %v478 = vld [vmem:[#allocation11 + $0x24] sm:$0xf]
      %v479 = vld [vmem:[#allocation11 + $0x28] sm:$0xf]
      %v480 = vld [vmem:[#allocation11 + $0x2c] sm:$0xf]
      %v481 = vld [vmem:[#allocation11 + $0x30] sm:$0xf]
      %v482 = vld [vmem:[#allocation11 + $0x34] sm:$0xf]
      %v483 = vld [vmem:[#allocation11 + $0x38] sm:$0xf]
      %v484 = vld [vmem:[#allocation11 + $0x3c] sm:$0xf]
      %v501 = vunpack.c.l.b16 %v469
      %v502 = vunpack.c.l.b16 %v470
      %v503 = vunpack.c.l.b16 %v471
      %v504 = vunpack.c.l.b16 %v472
      %v505 = vunpack.c.l.b16 %v473
      %v506 = vunpack.c.l.b16 %v474
      %v507 = vunpack.c.l.b16 %v475
      %v508 = vunpack.c.l.b16 %v476
      %v509 = vunpack.c.l.b16 %v477
      %v510 = vunpack.c.l.b16 %v478
      %v511 = vunpack.c.l.b16 %v479
      %v512 = vunpack.c.l.b16 %v480
      %v513 = vunpack.c.l.b16 %v481
      %v514 = vunpack.c.l.b16 %v482
      %v515 = vunpack.c.l.b16 %v483
      %v516 = vunpack.c.l.b16 %v484
      %v517 = vpack.c.b16 %v502, %v501
      %v518 = vpack.c.b16 %v504, %v503
      %v519 = vpack.c.b16 %v506, %v505
      %v520 = vpack.c.b16 %v508, %v507
      %v521 = vpack.c.b16 %v510, %v509
      %v522 = vpack.c.b16 %v512, %v511
      %v523 = vpack.c.b16 %v514, %v513
      %v524 = vpack.c.b16 %v516, %v515
      %v533 = vld [vmem:[%s6] sm:$0xf]
      %v534 = vld [vmem:[%s6 + $0x4] sm:$0xf]
      %v535 = vld [vmem:[%s6 + $0x8] sm:$0xf]
      %v536 = vld [vmem:[%s6 + $0xc] sm:$0xf]
      %v537 = vld [vmem:[%s6 + $0x10] sm:$0xf]
      %v538 = vld [vmem:[%s6 + $0x14] sm:$0xf]
      %v539 = vld [vmem:[%s6 + $0x18] sm:$0xf]
      %v540 = vld [vmem:[%s6 + $0x1c] sm:$0xf]
      %v541 = vld [vmem:[%s6 + $0x20] sm:$0xf]
      %v542 = vld [vmem:[%s6 + $0x24] sm:$0xf]
      %v543 = vld [vmem:[%s6 + $0x28] sm:$0xf]
      %v544 = vld [vmem:[%s6 + $0x2c] sm:$0xf]
      %v545 = vld [vmem:[%s6 + $0x30] sm:$0xf]
      %v546 = vld [vmem:[%s6 + $0x34] sm:$0xf]
      %v547 = vld [vmem:[%s6 + $0x38] sm:$0xf]
      %v548 = vld [vmem:[%s6 + $0x3c] sm:$0xf]
      %v549 = vld [vmem:[%s6 + $0x40] sm:$0xf]
      %v550 = vld [vmem:[%s6 + $0x44] sm:$0xf]
      %v551 = vld [vmem:[%s6 + $0x48] sm:$0xf]
      %v552 = vld [vmem:[%s6 + $0x4c] sm:$0xf]
      %v553 = vld [vmem:[%s6 + $0x50] sm:$0xf]
      %v554 = vld [vmem:[%s6 + $0x54] sm:$0xf]
      %v555 = vld [vmem:[%s6 + $0x58] sm:$0xf]
      %v556 = vld [vmem:[%s6 + $0x5c] sm:$0xf]
      %v557 = vld [vmem:[%s6 + $0x60] sm:$0xf]
      %v558 = vld [vmem:[%s6 + $0x64] sm:$0xf]
      %v559 = vld [vmem:[%s6 + $0x68] sm:$0xf]
      %v560 = vld [vmem:[%s6 + $0x6c] sm:$0xf]
      %v561 = vld [vmem:[%s6 + $0x70] sm:$0xf]
      %v562 = vld [vmem:[%s6 + $0x74] sm:$0xf]
      %v563 = vld [vmem:[%s6 + $0x78] sm:$0xf]
      %v564 = vld [vmem:[%s6 + $0x7c] sm:$0xf]
      %v565 = vld [vmem:[%s7] sm:$0x1]
      %v567 = vlaneseq
      %v568 = vshrl.u32 %v567, 7
      %v569 = vsub.s32 0, %v568
      %v570 = vrot.slane %v565, %v569
      %v604 = vunpack.c.l.b16 %v533
      %v605 = vunpack.c.l.b16 %v534
      %v606 = vunpack.c.l.b16 %v535
      %v607 = vunpack.c.l.b16 %v536
      %v608 = vunpack.c.l.b16 %v537
      %v609 = vunpack.c.l.b16 %v538
      %v610 = vunpack.c.l.b16 %v539
      %v611 = vunpack.c.l.b16 %v540
      %v612 = vunpack.c.l.b16 %v541
      %v613 = vunpack.c.l.b16 %v542
      %v614 = vunpack.c.l.b16 %v543
      %v615 = vunpack.c.l.b16 %v544
      %v616 = vunpack.c.l.b16 %v545
      %v617 = vunpack.c.l.b16 %v546
      %v618 = vunpack.c.l.b16 %v547
      %v619 = vunpack.c.l.b16 %v548
      %v620 = vunpack.c.l.b16 %v549
      %v621 = vunpack.c.l.b16 %v550
      %v622 = vunpack.c.l.b16 %v551
      %v623 = vunpack.c.l.b16 %v552
      %v624 = vunpack.c.l.b16 %v553
      %v625 = vunpack.c.l.b16 %v554
      %v626 = vunpack.c.l.b16 %v555
      %v627 = vunpack.c.l.b16 %v556
      %v628 = vunpack.c.l.b16 %v557
      %v629 = vunpack.c.l.b16 %v558
      %v630 = vunpack.c.l.b16 %v559
      %v631 = vunpack.c.l.b16 %v560
      %v632 = vunpack.c.l.b16 %v561
      %v633 = vunpack.c.l.b16 %v562
      %v634 = vunpack.c.l.b16 %v563
      %v635 = vunpack.c.l.b16 %v564
      %v636 = vpack.c.b16 %v605, %v604
      %v637 = vpack.c.b16 %v607, %v606
      %v638 = vpack.c.b16 %v609, %v608
      %v639 = vpack.c.b16 %v611, %v610
      %v640 = vpack.c.b16 %v613, %v612
      %v641 = vpack.c.b16 %v615, %v614
      %v642 = vpack.c.b16 %v617, %v616
      %v643 = vpack.c.b16 %v619, %v618
      %v644 = vpack.c.b16 %v621, %v620
      %v645 = vpack.c.b16 %v623, %v622
      %v646 = vpack.c.b16 %v625, %v624
      %v647 = vpack.c.b16 %v627, %v626
      %v648 = vpack.c.b16 %v629, %v628
      %v649 = vpack.c.b16 %v631, %v630
      %v650 = vpack.c.b16 %v633, %v632
      %v651 = vpack.c.b16 %v635, %v634
      %668 = vmatprep.subr.bf16.mxu0 0
      %669 = vmatpush1.bf16.msra.mxu0 %v643
      %670 = vmatprep.subr.bf16.mxu0 0
      %671 = vmatpush1.bf16.msra.mxu0 %v642
      %672 = vmatprep.subr.bf16.mxu0 0
      %673 = vmatpush1.bf16.msra.mxu0 %v641
      %674 = vmatprep.subr.bf16.mxu0 0
      %675 = vmatpush1.bf16.msra.mxu0 %v640
      %676 = vmatprep.subr.bf16.mxu0 0
      %677 = vmatpush1.bf16.msra.mxu0 %v639
      %678 = vmatprep.subr.bf16.mxu0 0
      %679 = vmatpush1.bf16.msra.mxu0 %v638
      %680 = vmatprep.subr.bf16.mxu0 0
      %681 = vmatpush1.bf16.msra.mxu0 %v637
      %682 = vmatprep.subr.bf16.mxu0 0
      %683 = vmatpush1.bf16.msra.mxu0 %v636
      %684 = vmatprep.subr.bf16.mxu0 0
      %685 = vmatpush2.bf16.msra.mxu0 %v651
      %686 = vmatprep.subr.bf16.mxu0 0
      %687 = vmatpush2.bf16.msra.mxu0 %v650
      %688 = vmatprep.subr.bf16.mxu0 0
      %689 = vmatpush2.bf16.msra.mxu0 %v649
      %690 = vmatprep.subr.bf16.mxu0 0
      %691 = vmatpush2.bf16.msra.mxu0 %v648
      %692 = vmatprep.subr.bf16.mxu0 0
      %693 = vmatpush2.bf16.msra.mxu0 %v647
      %694 = vmatprep.subr.bf16.mxu0 0
      %695 = vmatpush2.bf16.msra.mxu0 %v646
      %696 = vmatprep.subr.bf16.mxu0 0
      %697 = vmatpush2.bf16.msra.mxu0 %v645
      %698 = vmatprep.subr.bf16.mxu0 0
      %699 = vmatpush2.bf16.msra.mxu0 %v644
      %700 = vmatprep.mubr.bf16.mxu0 %v517
      %701 = vmatmul.mubr.bf16.gmra.mxu0 %v461
      %v702 = vpop.f32.mrf.mxu0
      %v703 = vadd.f32 %v570, %v702
      %v704 = vpop.f32.mrf.mxu0
      %v705 = vpop.f32.mrf.mxu0
      %v706 = vadd.f32 %v570, %v705
      %v707 = vpop.f32.mrf.mxu0
      %708 = vmatprep.mubr.bf16.mxu0 %v518
      %709 = vmatmul.mubr.bf16.gmra.mxu0 %v462
      %v710 = vpop.f32.mrf.mxu0
      %v711 = vadd.f32 %v570, %v710
      %v712 = vpop.f32.mrf.mxu0
      %v713 = vpop.f32.mrf.mxu0
      %v714 = vadd.f32 %v570, %v713
      %v715 = vpop.f32.mrf.mxu0
      %716 = vmatprep.mubr.bf16.mxu0 %v519
      %717 = vmatmul.mubr.bf16.gmra.mxu0 %v463
      %v718 = vpop.f32.mrf.mxu0
      %v719 = vadd.f32 %v570, %v718
      %v720 = vpop.f32.mrf.mxu0
      %v721 = vpop.f32.mrf.mxu0
      %v722 = vadd.f32 %v570, %v721
      %v723 = vpop.f32.mrf.mxu0
      %724 = vmatprep.mubr.bf16.mxu0 %v520
      %725 = vmatmul.mubr.bf16.gmra.mxu0 %v464
      %v726 = vpop.f32.mrf.mxu0
      %v727 = vadd.f32 %v570, %v726
      %v728 = vpop.f32.mrf.mxu0
      %v729 = vpop.f32.mrf.mxu0
      %v730 = vadd.f32 %v570, %v729
      %v731 = vpop.f32.mrf.mxu0
      %732 = vmatprep.mubr.bf16.mxu0 %v521
      %733 = vmatmul.mubr.bf16.gmra.mxu0 %v465
      %v734 = vpop.f32.mrf.mxu0
      %v735 = vadd.f32 %v570, %v734
      %v736 = vpop.f32.mrf.mxu0
      %v737 = vpop.f32.mrf.mxu0
      %v738 = vadd.f32 %v570, %v737
      %v739 = vpop.f32.mrf.mxu0
      %740 = vmatprep.mubr.bf16.mxu0 %v522
      %741 = vmatmul.mubr.bf16.gmra.mxu0 %v466
      %v742 = vpop.f32.mrf.mxu0
      %v743 = vadd.f32 %v570, %v742
      %v744 = vpop.f32.mrf.mxu0
      %v745 = vpop.f32.mrf.mxu0
      %v746 = vadd.f32 %v570, %v745
      %v747 = vpop.f32.mrf.mxu0
      %748 = vmatprep.mubr.bf16.mxu0 %v523
      %749 = vmatmul.mubr.bf16.gmra.mxu0 %v467
      %v750 = vpop.f32.mrf.mxu0
      %v751 = vadd.f32 %v570, %v750
      %v752 = vpop.f32.mrf.mxu0
      %v753 = vpop.f32.mrf.mxu0
      %v754 = vadd.f32 %v570, %v753
      %v755 = vpop.f32.mrf.mxu0
      %756 = vmatprep.mubr.bf16.mxu0 %v524
      %757 = vmatmul.mubr.bf16.gmra.mxu0 %v468
      %v758 = vpop.f32.mrf.mxu0
      %v759 = vadd.f32 %v570, %v758
      %v760 = vpop.f32.mrf.mxu0
      %v761 = vpop.f32.mrf.mxu0
      %v762 = vadd.f32 %v570, %v761
      %v763 = vpop.f32.mrf.mxu0
      %764 = vdwg.mxu0
      %v765 = vmax.f32 %v703, 0.0
      %v766 = vmax.f32 %v706, 0.0
      %v767 = vmax.f32 %v711, 0.0
      %v768 = vmax.f32 %v714, 0.0
      %v769 = vmax.f32 %v719, 0.0
      %v770 = vmax.f32 %v722, 0.0
      %v771 = vmax.f32 %v727, 0.0
      %v772 = vmax.f32 %v730, 0.0
      %v773 = vmax.f32 %v735, 0.0
      %v774 = vmax.f32 %v738, 0.0
      %v775 = vmax.f32 %v743, 0.0
      %v776 = vmax.f32 %v746, 0.0
      %v777 = vmax.f32 %v751, 0.0
      %v778 = vmax.f32 %v754, 0.0
      %v779 = vmax.f32 %v759, 0.0
      %v780 = vmax.f32 %v762, 0.0
      %v781 = vpack.c.bf16 %v766, %v765
      %v782 = vpack.c.bf16 %v768, %v767
      %v783 = vpack.c.bf16 %v770, %v769
      %v784 = vpack.c.bf16 %v772, %v771
      %v785 = vpack.c.bf16 %v774, %v773
      %v786 = vpack.c.bf16 %v776, %v775
      %v787 = vpack.c.bf16 %v778, %v777
      %v788 = vpack.c.bf16 %v780, %v779
      %v797 = vunpack.c.l.b16 %v781
      %v798 = vunpack.c.h.b16 %v781
      %v799 = vunpack.c.l.b16 %v782
      %v800 = vunpack.c.h.b16 %v782
      %v801 = vunpack.c.l.b16 %v783
      %v802 = vunpack.c.h.b16 %v783
      %v803 = vunpack.c.l.b16 %v784
      %v804 = vunpack.c.h.b16 %v784
      %v805 = vunpack.c.l.b16 %v785
      %v806 = vunpack.c.h.b16 %v785
      %v807 = vunpack.c.l.b16 %v786
      %v808 = vunpack.c.h.b16 %v786
      %v809 = vunpack.c.l.b16 %v787
      %v810 = vunpack.c.h.b16 %v787
      %v811 = vunpack.c.l.b16 %v788
      %v812 = vunpack.c.h.b16 %v788
      %v813 = vpack.c.b16 %v797, %v797
      %v814 = vpack.c.b16 %v798, %v798
      %v815 = vpack.c.b16 %v799, %v799
      %v816 = vpack.c.b16 %v800, %v800
      %v817 = vpack.c.b16 %v801, %v801
      %v818 = vpack.c.b16 %v802, %v802
      %v819 = vpack.c.b16 %v803, %v803
      %v820 = vpack.c.b16 %v804, %v804
      %v821 = vpack.c.b16 %v805, %v805
      %v822 = vpack.c.b16 %v806, %v806
      %v823 = vpack.c.b16 %v807, %v807
      %v824 = vpack.c.b16 %v808, %v808
      %v825 = vpack.c.b16 %v809, %v809
      %v826 = vpack.c.b16 %v810, %v810
      %v827 = vpack.c.b16 %v811, %v811
      %v828 = vpack.c.b16 %v812, %v812
      %845 = vst [vmem:[#allocation12] sm:$0xf] %v813
      %846 = vst [vmem:[#allocation12 + $0x4] sm:$0xf] %v814
      %847 = vst [vmem:[#allocation12 + $0x8] sm:$0xf] %v815
      %848 = vst [vmem:[#allocation12 + $0xc] sm:$0xf] %v816
      %849 = vst [vmem:[#allocation12 + $0x10] sm:$0xf] %v817
      %850 = vst [vmem:[#allocation12 + $0x14] sm:$0xf] %v818
      %851 = vst [vmem:[#allocation12 + $0x18] sm:$0xf] %v819
      %852 = vst [vmem:[#allocation12 + $0x1c] sm:$0xf] %v820
      %853 = vst [vmem:[#allocation12 + $0x20] sm:$0xf] %v821
      %854 = vst [vmem:[#allocation12 + $0x24] sm:$0xf] %v822
      %855 = vst [vmem:[#allocation12 + $0x28] sm:$0xf] %v823
      %856 = vst [vmem:[#allocation12 + $0x2c] sm:$0xf] %v824
      %857 = vst [vmem:[#allocation12 + $0x30] sm:$0xf] %v825
      %858 = vst [vmem:[#allocation12 + $0x34] sm:$0xf] %v826
      %859 = vst [vmem:[#allocation12 + $0x38] sm:$0xf] %v827
      %860 = vst [vmem:[#allocation12 + $0x3c] sm:$0xf] %v828
    $region49: #{tpu_custom_call.1} parent=1 // pred_fallthru
      _
    // Predicated region
    $region50: #{tpu_custom_call.1} parent=1 // pred_check
      _
    $region51: #{tpu_custom_call.1} parent=1 // pred_check_branch
      %862 = sbr.rel (0) target = $region53
    $region52: #{tpu_custom_call.1} parent=1 // pred_region
      %s864 = ssub.s32 1024, 1024
      %865 = vsyncadd [#allocation8], %s864
      %s866 = sshll.u32 [#allocation12], 4
      %s867 = int_to_ptr.vmem [resolvable:$true] %s866
      %872 = dma.vmem_to_hbm [thread:$0]  %s867, 1024, %s8, [#allocation8], 64, 64, 4
    $region53: #{tpu_custom_call.1} parent=1 // pred_fallthru
      _
    // Predicated region
    $region54: #{tpu_custom_call.1} parent=1 // pred_check
      _
    $region55: #{tpu_custom_call.1} parent=1 // pred_check_branch
      %874 = sbr.rel (0) target = $region57
    $region56: #{tpu_custom_call.1} parent=1 // pred_region
      %875 = dma.done [#allocation8], 1024
    $region57: #{tpu_custom_call.1} parent=1 // pred_fallthru
      _
    %876 = vsyncpa [#allocation7], 1
    %877 = vsyncpa [#allocation10], 1
    %878 = vsyncpa [#allocation8], 1

</llo_original>
